<compile_context>
chip_gen: v7x
topology: tpu7x:2x2x1
jax: 0.10.0
libtpu: 0.0.40
codegen_flags: <defaults>
</compile_context>

<pallas_src>
import functools

import jax
import jax.numpy as jnp
from jax.experimental import pallas as pl
from jax.experimental.pallas import tpu as pltpu


def _round_up(x: int, m: int) -> int:
    return ((x + m - 1) // m) * m


def _labeller_kernel(x_ref, ct_ref, bias_ref, probs_ref):
    """Soft nearest-centroid labelling for one tile of samples.

    x_ref:     [TN, D]   bfloat16  sample tile
    ct_ref:    [D,  KP]  bfloat16  2 * centroids, transposed, lane-padded
    bias_ref:  [1,  KP]  float32   -||c||^2 (valid cols) / -1e30 (pad cols)
    probs_ref: [TN, K]   bfloat16  softmax probabilities (valid columns only)
    """
    # logits = -||x - c||^2 + ||x||^2 = x . (2c) - ||c||^2
    # (per-row ||x||^2 dropped: softmax/argmax are shift invariant; the factor
    #  of 2 is folded into ct_ref at construction time).
    logits = jnp.dot(x_ref[...], ct_ref[...],
                     preferred_element_type=jnp.float32) + bias_ref[...]

    # Numerically stable softmax over codes — all math in f32, bf16 only at the
    # final store.  Padded columns carry -1e30 bias -> exp() == 0 contribution.
    m = jnp.max(logits, axis=-1, keepdims=True)              # [TN, 1]
    e = jnp.exp(logits - m)                                   # EUP
    denom = jnp.sum(e, axis=-1, keepdims=True)                # XLU
    inv = pl.reciprocal(denom, approx=False)                  # exact; mem-bound kernel

    k = probs_ref.shape[-1]
    probs_ref[...] = (e[:, :k] * inv).astype(probs_ref.dtype)


class PallasLabeller:
    """Concrete realization of the abstract `Labeller` interface."""

    def __init__(self, num_codes: int, dim: int, max_tile_n: int = 2048):
        self.num_codes = int(num_codes)
        self.dim = int(dim)
        self.max_tile_n = int(max_tile_n)

        # Deterministic synthetic centroids (no checkpoint load).
        key = jax.random.PRNGKey(42)
        centroids = jax.random.normal(key, (num_codes, dim), dtype=jnp.float32)
        self.centroids = centroids

        # Precompute everything invariant across forward() calls:
        #   * 2 * centroids, transposed, lane-padded to K_pad, cast to bf16 for
        #     the MXU, so the kernel computes logits = x @ (2c)^T - ||c||^2.
        #   * bias row: -||c||^2 for valid codes, -1e30 for padded lanes so
        #     padded columns never contribute to the softmax.
        k_pad = max(_round_up(num_codes, 128), 128)
        self.k_pad = k_pad
        ct = jnp.zeros((dim, k_pad), jnp.float32)
        ct = ct.at[:, :num_codes].set(2.0 * jnp.transpose(centroids))
        self.ct2_bf16 = ct.astype(jnp.bfloat16)
        c2 = jnp.sum(centroids * centroids, axis=-1)           # [K]
        bias = jnp.full((1, k_pad), -1e30, dtype=jnp.float32)
        self.c2_bias = bias.at[0, :num_codes].set(-c2)

        # Per-generation VMEM capacity (v7x: 64 MiB, v5e/v6e: 128 MiB).
        try:
            self._vmem_cap = int(pltpu.get_tpu_info().vmem_capacity_bytes)
        except Exception:
            self._vmem_cap = 64 * 1024 * 1024   # conservative fallback (v7x)

    # ---- tiling / VMEM sizing ------------------------------------------- #

    def _vmem_budget(self) -> int:
        # Leave ~25% headroom for compiler-internal scratch.
        return int(self._vmem_cap * 3 // 4)

    def _tile_row_bytes(self) -> int:
        # Per N-tile-row VMEM: double-buffered x (bf16), double-buffered probs
        # (bf16, num_codes lanes), plus f32 logits/exp intermediates over K_pad.
        return (2 * self.dim * 2
                + 2 * self.num_codes * 2
                + 2 * self.k_pad * 4)

    def _resident_bytes(self) -> int:
        # Centroids + bias row; counted double-buffered (conservative in case
        # the single-buffer request for constants is not honoured).
        return 2 * (self.dim * self.k_pad * 2 + 8 * self.k_pad * 4)

    def _choose_tile_n(self, n: int) -> int:
        avail = self._vmem_budget() - self._resident_bytes() - (4 << 20)
        row = self._tile_row_bytes()
        tile_cap = max(16, min(self.max_tile_n,
                               (max(avail, 16 * row) // row) // 16 * 16))
        # TODO(synk): for codebooks so large that the resident centroids alone
        # exceed VMEM, add a second "arbitrary" grid axis over K_pad with an
        # online-softmax accumulator instead of relying on a tiny tile_n.

        n16 = _round_up(n, 16)                 # bf16 packs 16 rows per vreg
        tile_n = min(tile_cap, n16)
        # v7x has 2 TensorCores: ensure the "parallel" N axis has >= 2 steps
        # whenever the batch allows it (no effect on v5e/v6e correctness).
        if n16 >= 32 and _round_up(n, tile_n) // tile_n < 2:
            tile_n = max(16, _round_up((n16 + 1) // 2, 16))
        return tile_n

    def _vmem_limit_bytes(self, tile_n: int) -> int:
        need = tile_n * self._tile_row_bytes() + self._resident_bytes() + (4 << 20)
        return int(min(self._vmem_budget(), max(need, 8 << 20)))

    # ---- Labeller interface --------------------------------------------- #

    def fit(self, x=None) -> None:
        # TODO(synk): `fit` is abstract in the reference module -- no concrete
        # semantics to translate; centroids are fixed deterministically here.
        del x

    @functools.partial(jax.jit, static_argnums=(0, 2, 3))
    def _run(self, x_bf16, tile_n: int, single_buffer_consts: bool):
        n_pad, d = x_bf16.shape
        k, k_pad = self.num_codes, self.k_pad
        grid = (n_pad // tile_n,)

        def const_spec(shape):
            index_map = lambda i: (0,) * len(shape)
            if single_buffer_consts and hasattr(pl, "Buffered"):
                # Constant index_map -> one buffer suffices; halves the
                # resident VMEM held by the centroids.
                return pl.BlockSpec(shape, index_map,
                                    pipeline_mode=pl.Buffered(1))
            return pl.BlockSpec(shape, index_map)

        return pl.pallas_call(
            _labeller_kernel,
            out_shape=jax.ShapeDtypeStruct((n_pad, k), jnp.bfloat16),
            grid=grid,
            in_specs=[
                pl.BlockSpec((tile_n, d), lambda i: (i, 0)),
                const_spec((d, k_pad)),
                const_spec((1, k_pad)),
            ],
            out_specs=pl.BlockSpec((tile_n, k), lambda i: (i, 0)),
            compiler_params=pltpu.CompilerParams(
                dimension_semantics=("parallel",),
                vmem_limit_bytes=self._vmem_limit_bytes(tile_n),
            ),
        )(x_bf16, self.ct2_bf16, self.c2_bias)

    def forward(self, x):
        n, d = x.shape
        assert d == self.dim

        tile_n = self._choose_tile_n(n)
        n_pad = _round_up(n, tile_n)
        x_bf16 = x.astype(jnp.bfloat16)
        if n_pad != n:
            x_bf16 = jnp.pad(x_bf16, ((0, n_pad - n), (0, 0)))

        try:
            probs_pad = self._run(x_bf16, tile_n, True)
        except Exception:
            # pl.Buffered(1) unsupported on this jax/libtpu combination:
            # fall back to default (double) buffering for the constants.
            probs_pad = self._run(x_bf16, tile_n, False)

        # The kernel already writes only the `num_codes` valid columns; the
        # only remaining depad is over padded rows (only when N was padded).
        return probs_pad if n_pad == n else probs_pad[:n]

    def probs_to_code(self, probs):
        # Compute from the argument (no cached side-state): correct for any
        # probs tensor, vmap-safe.
        return jnp.argmax(probs, axis=-1).astype(jnp.int32)

    def idx_to_code(self, idx):
        # One-hot code lookup (pure glue).
        return jax.nn.one_hot(idx, self.num_codes, dtype=jnp.float32)


if __name__ == "__main__":
    N, D, K = 16, 32, 8
    key = jax.random.PRNGKey(0)
    x = jax.random.normal(key, (N, D), dtype=jnp.float32)

    labeller = PallasLabeller(num_codes=K, dim=D)
    labeller.fit(x)

    probs = jax.block_until_ready(labeller.forward(x))
    codes = jax.block_until_ready(labeller.probs_to_code(probs))
    onehot = jax.block_until_ready(labeller.idx_to_code(codes))

    assert probs.shape == (N, K) and probs.dtype == jnp.bfloat16
    assert codes.shape == (N,)
    assert onehot.shape == (N, K)

    # f32 reference that matches the kernel's bf16 MXU operands.
    xb = x.astype(jnp.bfloat16).astype(jnp.float32)
    ctb = labeller.ct2_bf16[:, :K].astype(jnp.float32)
    ref_logits = xb @ ctb + labeller.c2_bias[:, :K]
    ref_probs = jax.nn.softmax(ref_logits, axis=-1)
    ref_codes = jnp.argmax(ref_probs, axis=-1).astype(jnp.int32)

    p32 = probs.astype(jnp.float32)
    # Rows sum to ~1 (bf16 output quantization -> loose tolerance).
    assert bool(jnp.allclose(jnp.sum(p32, axis=-1), 1.0, atol=5e-2))
    # Probabilities match the f32 reference up to bf16 store quantization.
    assert bool(jnp.allclose(p32, ref_probs, atol=2e-2))
    # Codes agree with the reference argmax (allow a couple of near-tie flips
    # caused by bf16 quantization of the stored probs).
    assert int(jnp.sum(codes == ref_codes)) >= N - 2
    # probs_to_code is by definition argmax of its argument.
    assert bool(jnp.all(codes == jnp.argmax(p32, axis=-1)))

    print("KERNEL_OK")
</pallas_src>

<mosaic_0001>
module attributes {stable_mosaic.version = 11 : i64} {
  func.func @_labeller_kernel(%arg0: i32, %arg1: memref<16x32xbf16, #tpu.memory_space<vmem>>, %arg2: memref<32x128xbf16, #tpu.memory_space<vmem>>, %arg3: memref<1x128xf32, #tpu.memory_space<vmem>>, %arg4: memref<16x8xbf16, #tpu.memory_space<vmem>>) attributes {dimension_semantics = [#tpu.dimension_semantics<parallel>], iteration_bounds = array<i64: 1>, scalar_prefetch = 0 : i64, scratch_operands = 0 : i64, tpu.core_type = #tpu.core_type<tc>, window_params = [{transform_indices = @transform_0, window_bounds = array<i64: 16, 32>}, {pipeline_mode = #tpu.pipeline_mode<synchronous>, transform_indices = @transform_1, window_bounds = array<i64: 32, 128>}, {pipeline_mode = #tpu.pipeline_mode<synchronous>, transform_indices = @transform_2, window_bounds = array<i64: 1, 128>}, {transform_indices = @transform_3, window_bounds = array<i64: 16, 8>}]} {
    %c0 = arith.constant 0 : index
    %c0_0 = arith.constant 0 : index
    %0 = vector.load %arg1[%c0, %c0_0] : memref<16x32xbf16, #tpu.memory_space<vmem>>, vector<16x32xbf16>
    %c0_1 = arith.constant 0 : index
    %c0_2 = arith.constant 0 : index
    %1 = vector.load %arg2[%c0_1, %c0_2] : memref<32x128xbf16, #tpu.memory_space<vmem>>, vector<32x128xbf16>
    %cst = arith.constant dense<0.000000e+00> : vector<16x128xf32>
    %2 = tpu.matmul %0, %1, %cst {dimension_numbers = #tpu.dot_dimension_numbers<[1], [0], [0], [1], [0, 0, 1, 1], [], []>} : vector<16x32xbf16>, vector<32x128xbf16>, vector<16x128xf32> -> vector<16x128xf32>
    %c0_3 = arith.constant 0 : index
    %c0_4 = arith.constant 0 : index
    %3 = vector.load %arg3[%c0_3, %c0_4] : memref<1x128xf32, #tpu.memory_space<vmem>>, vector<1x128xf32>
    %4 = vector.broadcast %3 : vector<1x128xf32> to vector<16x128xf32>
    %5 = arith.addf %2, %4 : vector<16x128xf32>
    %cst_5 = arith.constant dense<0xFF800000> : vector<16xf32>
    %6 = vector.multi_reduction <maximumf>, %5, %cst_5 [1] : vector<16x128xf32> to vector<16xf32>
    %7 = vector.shape_cast %6 : vector<16xf32> to vector<16x1xf32>
    %8 = vector.broadcast %7 : vector<16x1xf32> to vector<16x128xf32>
    %9 = arith.subf %5, %8 : vector<16x128xf32>
    %10 = math.exp %9 : vector<16x128xf32>
    %cst_6 = arith.constant dense<0.000000e+00> : vector<16xf32>
    %11 = vector.multi_reduction <add>, %10, %cst_6 [1] : vector<16x128xf32> to vector<16xf32>
    %12 = vector.shape_cast %11 : vector<16xf32> to vector<16x1xf32>
    %13 = tpu.reciprocal %12 : vector<16x1xf32> -> vector<16x1xf32>
    %14 = vector.extract_strided_slice %10 {offsets = [0, 0], sizes = [16, 8], strides = [1, 1]} : vector<16x128xf32> to vector<16x8xf32>
    %15 = vector.broadcast %13 : vector<16x1xf32> to vector<16x8xf32>
    %16 = arith.mulf %14, %15 : vector<16x8xf32>
    %17 = arith.truncf %16 : vector<16x8xf32> to vector<16x8xbf16>
    %c0_7 = arith.constant 0 : index
    %c0_8 = arith.constant 0 : index
    %18 = vector.load %arg4[%c0_7, %c0_8] : memref<16x8xbf16, #tpu.memory_space<vmem>>, vector<16x8xbf16>
    tpu.vector_store %arg4[%c0_7, %c0_8], %17 {strides = array<i32>} : memref<16x8xbf16, #tpu.memory_space<vmem>>, vector<16x8xbf16>,
    return
  }
  func.func @transform_0(%arg0: i32) -> (i32, i32) {
    %c0_i32 = arith.constant 0 : i32
    %c0_i32_0 = arith.constant 0 : i32
    return %arg0, %c0_i32 : i32, i32
  }
  func.func @transform_1(%arg0: i32) -> (i32, i32) {
    %c0_i32 = arith.constant 0 : i32
    %c0_i32_0 = arith.constant 0 : i32
    %c0_i32_1 = arith.constant 0 : i32
    return %c0_i32, %c0_i32_0 : i32, i32
  }
  func.func @transform_2(%arg0: i32) -> (i32, i32) {
    %c0_i32 = arith.constant 0 : i32
    %c0_i32_0 = arith.constant 0 : i32
    %c0_i32_1 = arith.constant 0 : i32
    return %c0_i32, %c0_i32_0 : i32, i32
  }
  func.func @transform_3(%arg0: i32) -> (i32, i32) {
    %c0_i32 = arith.constant 0 : i32
    %c0_i32_0 = arith.constant 0 : i32
    return %arg0, %c0_i32 : i32, i32
  }
}

module attributes {stable_mosaic.version = 11 : i64} {
  func.func @_labeller_kernel(%arg0: i32, %arg1: memref<16x32xbf16, #tpu.memory_space<vmem>>, %arg2: memref<32x128xbf16, #tpu.memory_space<vmem>>, %arg3: memref<1x128xf32, #tpu.memory_space<vmem>>, %arg4: memref<16x8xbf16, #tpu.memory_space<vmem>>) attributes {dimension_semantics = [#tpu.dimension_semantics<parallel>], iteration_bounds = array<i64: 1>, scalar_prefetch = 0 : i64, scratch_operands = 0 : i64, tpu.core_type = #tpu.core_type<tc>, window_params = [{transform_indices = @transform_0, window_bounds = array<i64: 16, 32>}, {pipeline_mode = #tpu.pipeline_mode<synchronous>, transform_indices = @transform_1, window_bounds = array<i64: 32, 128>}, {pipeline_mode = #tpu.pipeline_mode<synchronous>, transform_indices = @transform_2, window_bounds = array<i64: 1, 128>}, {transform_indices = @transform_3, window_bounds = array<i64: 16, 8>}]} {
    %c0 = arith.constant 0 : index
    %c0_0 = arith.constant 0 : index
    %0 = vector.load %arg1[%c0, %c0_0] : memref<16x32xbf16, #tpu.memory_space<vmem>>, vector<16x32xbf16>
    %c0_1 = arith.constant 0 : index
    %c0_2 = arith.constant 0 : index
    %1 = vector.load %arg2[%c0_1, %c0_2] : memref<32x128xbf16, #tpu.memory_space<vmem>>, vector<32x128xbf16>
    %cst = arith.constant dense<0.000000e+00> : vector<16x128xf32>
    %2 = tpu.matmul %0, %1, %cst {dimension_numbers = #tpu.dot_dimension_numbers<[1], [0], [0], [1], [0, 0, 1, 1], [], []>} : vector<16x32xbf16>, vector<32x128xbf16>, vector<16x128xf32> -> vector<16x128xf32>
    %c0_3 = arith.constant 0 : index
    %c0_4 = arith.constant 0 : index
    %3 = vector.load %arg3[%c0_3, %c0_4] : memref<1x128xf32, #tpu.memory_space<vmem>>, vector<1x128xf32>
    %4 = vector.broadcast %3 : vector<1x128xf32> to vector<16x128xf32>
    %5 = arith.addf %2, %4 : vector<16x128xf32>
    %cst_5 = arith.constant dense<0xFF800000> : vector<16xf32>
    %6 = vector.multi_reduction <maximumf>, %5, %cst_5 [1] : vector<16x128xf32> to vector<16xf32>
    %7 = vector.shape_cast %6 : vector<16xf32> to vector<16x1xf32>
    %8 = vector.broadcast %7 : vector<16x1xf32> to vector<16x128xf32>
    %9 = arith.subf %5, %8 : vector<16x128xf32>
    %10 = math.exp %9 : vector<16x128xf32>
    %cst_6 = arith.constant dense<0.000000e+00> : vector<16xf32>
    %11 = vector.multi_reduction <add>, %10, %cst_6 [1] : vector<16x128xf32> to vector<16xf32>
    %12 = vector.shape_cast %11 : vector<16xf32> to vector<16x1xf32>
    %13 = tpu.reciprocal %12 : vector<16x1xf32> -> vector<16x1xf32>
    %14 = vector.extract_strided_slice %10 {offsets = [0, 0], sizes = [16, 8], strides = [1, 1]} : vector<16x128xf32> to vector<16x8xf32>
    %15 = vector.broadcast %13 : vector<16x1xf32> to vector<16x8xf32>
    %16 = arith.mulf %14, %15 : vector<16x8xf32>
    %17 = arith.truncf %16 : vector<16x8xf32> to vector<16x8xbf16>
    %c0_7 = arith.constant 0 : index
    %c0_8 = arith.constant 0 : index
    %18 = vector.load %arg4[%c0_7, %c0_8] : memref<16x8xbf16, #tpu.memory_space<vmem>>, vector<16x8xbf16>
    tpu.vector_store %arg4[%c0_7, %c0_8], %17 {strides = array<i32>} : memref<16x8xbf16, #tpu.memory_space<vmem>>, vector<16x8xbf16>,
    return
  }
  func.func @transform_0(%arg0: i32) -> (i32, i32) {
    %c0_i32 = arith.constant 0 : i32
    %c0_i32_0 = arith.constant 0 : i32
    return %arg0, %c0_i32 : i32, i32
  }
  func.func @transform_1(%arg0: i32) -> (i32, i32) {
    %c0_i32 = arith.constant 0 : i32
    %c0_i32_0 = arith.constant 0 : i32
    %c0_i32_1 = arith.constant 0 : i32
    return %c0_i32, %c0_i32_0 : i32, i32
  }
  func.func @transform_2(%arg0: i32) -> (i32, i32) {
    %c0_i32 = arith.constant 0 : i32
    %c0_i32_0 = arith.constant 0 : i32
    %c0_i32_1 = arith.constant 0 : i32
    return %c0_i32, %c0_i32_0 : i32, i32
  }
  func.func @transform_3(%arg0: i32) -> (i32, i32) {
    %c0_i32 = arith.constant 0 : i32
    %c0_i32_0 = arith.constant 0 : i32
    return %arg0, %c0_i32 : i32, i32
  }
}

</mosaic_0001>

<llo_original>
// kernel: _run.1
$region0: #{_run.1}
  #allocation0 [shape = 'u32[]', space=smem, size = 0x4, offset = 0x4, fixed_abs, tag = 'smem constant byte address 0x4 - core index']
  #allocation1 [shape = 'u32[144,128]{1,0:T(1,128)}', space=vmem, size = 0x12000, scoped, tag = 'internal scratch']
  %s0 = inlined_call_operand.hbm [shape: bf16[16,32], index: 0, kind: input, shape index: {}]
  %s1 = inlined_call_operand.hbm [shape: bf16[32,128], index: 1, kind: input, shape index: {}]
  %s2 = inlined_call_operand.vmem [shape: f32[1,128], index: 2, kind: input, shape index: {}]
  %s3 = inlined_call_operand.vmem [shape: bf16[16,8], index: 3, kind: output, shape index: {}]
  %s4 = sld [smem:[#allocation0]]
  $region30: #{_run.1} parent=0
    _
  %s6 = ssub.s32 1, %s4
  %s7 = scalar_select 0, %s6, %s4
  $region1: #{_run.1} parent=0
    #allocation2 [shape = 'u8[4096]{0}', space=vmem, size = 0x1000, scoped, tag = 'input window, operand 0, single buffered']
    #allocation3 [shape = 's32[1]{0}', space=sflag, size = 0x4, scoped, tag = 'scoped memory for _run.1']
    #allocation4 [shape = 'u8[8192]{0}', space=vmem, size = 0x2000, scoped, tag = 'input window, operand 1, single buffered']
    #allocation5 [shape = 's32[1]{0}', space=sflag, size = 0x4, scoped, tag = 'scoped memory for _run.1']
    %8 = vsyncpa [#allocation3], 0
    %9 = vsyncpa [#allocation5], 0
    // Predicated region
    $region2: #{_run.1} parent=1 // pred_check
      _
    $region3: #{_run.1} parent=1 // pred_check_branch
      %11 = sbr.rel (0) target = $region5
    $region4: #{_run.1} parent=1 // pred_region
      %s13 = ssub.s32 128, 128
      %14 = vsyncadd [#allocation3], %s13
      %s15 = sshll.u32 [#allocation2], 4
      %s16 = int_to_ptr.vmem [resolvable:$true] %s15
      %21 = dma.hbm_to_vmem [thread:$0]  %s0, 128, %s16, [#allocation3], 64, 64, 4
    $region5: #{_run.1} parent=1 // pred_fallthru
      _
    // Predicated region
    $region6: #{_run.1} parent=1 // pred_check
      _
    $region7: #{_run.1} parent=1 // pred_check_branch
      %23 = sbr.rel (0) target = $region9
    $region8: #{_run.1} parent=1 // pred_region
      %s25 = ssub.s32 256, 256
      %26 = vsyncadd [#allocation5], %s25
      %s27 = sshll.u32 [#allocation4], 4
      %s28 = int_to_ptr.vmem [resolvable:$true] %s27
      %33 = dma.hbm_to_vmem [thread:$0]  %s1, 256, %s28, [#allocation5], 64, 64, 4
    $region9: #{_run.1} parent=1 // pred_fallthru
      _
    // Predicated region
    $region10: #{_run.1} parent=1 // pred_check
      _
    $region11: #{_run.1} parent=1 // pred_check_branch
      %35 = sbr.rel (0) target = $region13
    $region12: #{_run.1} parent=1 // pred_region
      _
    $region13: #{_run.1} parent=1 // pred_fallthru
      _
    // Predicated region
    $region14: #{_run.1} parent=1 // pred_check
      _
    $region15: #{_run.1} parent=1 // pred_check_branch
      %37 = sbr.rel (0) target = $region17
    $region16: #{_run.1} parent=1 // pred_region
      %38 = dma.done [#allocation3], 128
    $region17: #{_run.1} parent=1 // pred_fallthru
      _
    // Predicated region
    $region18: #{_run.1} parent=1 // pred_check
      _
    $region19: #{_run.1} parent=1 // pred_check_branch
      %40 = sbr.rel (0) target = $region21
    $region20: #{_run.1} parent=1 // pred_region
      %41 = dma.done [#allocation5], 256
    $region21: #{_run.1} parent=1 // pred_fallthru
      _
    %v43 = vld [vmem:[#allocation2] sm:$0xf]
    %v44 = vld [vmem:[#allocation2 + $0x4] sm:$0xf]
    %v45 = vld [vmem:[#allocation4] sm:$0xf]
    %v46 = vld [vmem:[#allocation4 + $0x4] sm:$0xf]
    %v47 = vld [vmem:[#allocation4 + $0x8] sm:$0xf]
    %v48 = vld [vmem:[#allocation4 + $0xc] sm:$0xf]
    %v49 = vld [vmem:[%s2] sm:$0x1]
    %v51 = vlaneseq
    %v52 = vshrl.u32 %v51, 7
    %v53 = vsub.s32 0, %v52
    %v54 = vrot.slane %v49, %v53
    %v58 = vunpack.c.l.b16 %v43
    %v59 = vunpack.c.l.b16 %v44
    %v60 = vpack.c.b16 %v59, %v58
    %v65 = vunpack.c.l.b16 %v45
    %v66 = vunpack.c.l.b16 %v46
    %v67 = vunpack.c.l.b16 %v47
    %v68 = vunpack.c.l.b16 %v48
    %v69 = vpack.c.b16 %v66, %v65
    %v70 = vpack.c.b16 %v68, %v67
    %vm73 = vcmask 261120
    %v75 = vsel %vm73, %v60, 0
    %77 = vmatprep.subr.bf16.mxu0 0
    %78 = vmatpush1.bf16.msra.mxu0 %v69
    %79 = vmatprep.subr.bf16.mxu0 0
    %80 = vmatpush1.bf16.msra.mxu0 %v70
    %81 = vmatprep.subr.bf16.mxu0 0
    %82 = vmatpush1.bf16.msra.mxu0 0
    %83 = vmatprep.subr.bf16.mxu0 0
    %84 = vmatpush1.bf16.msra.mxu0 0
    %85 = vmatprep.subr.bf16.mxu0 0
    %86 = vmatpush1.bf16.msra.mxu0 0
    %87 = vmatprep.subr.bf16.mxu0 0
    %88 = vmatpush1.bf16.msra.mxu0 0
    %89 = vmatprep.subr.bf16.mxu0 0
    %90 = vmatpush1.bf16.msra.mxu0 0
    %91 = vmatprep.subr.bf16.mxu0 0
    %92 = vmatpush1.bf16.msra.mxu0 0
    %93 = vmatprep.subr.bf16.mxu0 0
    %94 = vmatpush1.bf16.msra.mxu0 0
    %95 = vmatprep.subr.bf16.mxu0 0
    %96 = vmatpush1.bf16.msra.mxu0 0
    %97 = vmatprep.subr.bf16.mxu0 0
    %98 = vmatpush1.bf16.msra.mxu0 0
    %99 = vmatprep.subr.bf16.mxu0 0
    %100 = vmatpush1.bf16.msra.mxu0 0
    %101 = vmatprep.subr.bf16.mxu0 0
    %102 = vmatpush1.bf16.msra.mxu0 0
    %103 = vmatprep.subr.bf16.mxu0 0
    %104 = vmatpush1.bf16.msra.mxu0 0
    %105 = vmatprep.subr.bf16.mxu0 0
    %106 = vmatpush1.bf16.msra.mxu0 0
    %107 = vmatprep.subr.bf16.mxu0 0
    %108 = vmatpush1.bf16.msra.mxu0 0
    %109 = vmatprep.mubr.bf16.mxu0 0
    %110 = vmatmul.mubr.bf16.gmra.mrb[0].mxu0 %v75
    %v111 = vpop.f32.mrb[0].mxu0
    %v112 = vadd.f32 %v54, %v111
    %v113 = vpop.f32.mrb[0].mxu0
    %v114 = vpop.f32.mrb[0].mxu0
    %v115 = vadd.f32 %v54, %v114
    %v116 = vpop.f32.mrb[0].mxu0
    %117 = vdwg.mxu0
    %118 = vmax.xlane.f32.xlu0 %v112
    %v119 = vpop.xlane.xlu0 %118
    %120 = vmax.xlane.f32.xlu0 %v115
    %v121 = vpop.xlane.xlu0 %120
    %v122 = vsub.f32 %v112, %v119
    %v123 = vsub.f32 %v115, %v121
    %v124 = vmul.f32 %v122, 1.442695
    %v125 = vpow.pop %v124
    %v126 = vmul.f32 %v123, 1.442695
    %v127 = vpow.pop %v126
    %128 = vadd.xlane.f32.xlu0 %v125
    %v129 = vpop.xlane.xlu0 %128
    %130 = vadd.xlane.f32.xlu0 %v127
    %v131 = vpop.xlane.xlu0 %130
    %v132 = vrcp.pop %v129
    %v133 = vrcp.pop %v131
    %v134 = vmul.f32 %v125, %v132
    %v135 = vmul.f32 %v127, %v133
    %v136 = vpack.c.bf16 %v135, %v134
    %v138 = vunpack.c.l.b16 %v136
    %v139 = vunpack.c.h.b16 %v136
    %v140 = vpack.c.b16 %v138, %v138
    %v141 = vpack.c.b16 %v139, %v139
    %vm144 = vcmask 60416
    %145 = vst.msk [vmem:[%s3] sm:$0xf] %vm144, %v140
    %146 = vst.msk [vmem:[%s3 + $0x4] sm:$0xf] %vm144, %v141
    // Predicated region
    $region22: #{_run.1} parent=1 // pred_check
      _
    $region23: #{_run.1} parent=1 // pred_check_branch
      %148 = sbr.rel (0) target = $region25
    $region24: #{_run.1} parent=1 // pred_region
      _
    $region25: #{_run.1} parent=1 // pred_fallthru
      _
    // Predicated region
    $region26: #{_run.1} parent=1 // pred_check
      _
    $region27: #{_run.1} parent=1 // pred_check_branch
      %150 = sbr.rel (0) target = $region29
    $region28: #{_run.1} parent=1 // pred_region
      _
    $region29: #{_run.1} parent=1 // pred_fallthru
      _
    %151 = vsyncpa [#allocation3], 1
    %152 = vsyncpa [#allocation5], 1

// kernel: _run.1
$region0: #{_run.1}
  #allocation0 [shape = 'u32[]', space=smem, size = 0x4, offset = 0x4, fixed_abs, tag = 'smem constant byte address 0x4 - core index']
  #allocation1 [shape = 'u32[144,128]{1,0:T(1,128)}', space=vmem, size = 0x12000, scoped, tag = 'internal scratch']
  %s0 = inlined_call_operand.hbm [shape: bf16[16,32], index: 0, kind: input, shape index: {}]
  %s1 = inlined_call_operand.hbm [shape: bf16[32,128], index: 1, kind: input, shape index: {}]
  %s2 = inlined_call_operand.vmem [shape: f32[1,128], index: 2, kind: input, shape index: {}]
  %s3 = inlined_call_operand.vmem [shape: bf16[16,8], index: 3, kind: output, shape index: {}]
  %s4 = sld [smem:[#allocation0]]
  $region30: #{_run.1} parent=0
    _
  %s6 = ssub.s32 1, %s4
  %s7 = scalar_select 0, %s6, %s4
  $region1: #{_run.1} parent=0
    #allocation2 [shape = 'u8[4096]{0}', space=vmem, size = 0x1000, scoped, tag = 'input window, operand 0, single buffered']
    #allocation3 [shape = 's32[1]{0}', space=sflag, size = 0x4, scoped, tag = 'scoped memory for _run.1']
    #allocation4 [shape = 'u8[8192]{0}', space=vmem, size = 0x2000, scoped, tag = 'input window, operand 1, single buffered']
    #allocation5 [shape = 's32[1]{0}', space=sflag, size = 0x4, scoped, tag = 'scoped memory for _run.1']
    %8 = vsyncpa [#allocation3], 0
    %9 = vsyncpa [#allocation5], 0
    // Predicated region
    $region2: #{_run.1} parent=1 // pred_check
      _
    $region3: #{_run.1} parent=1 // pred_check_branch
      %11 = sbr.rel (0) target = $region5
    $region4: #{_run.1} parent=1 // pred_region
      %s13 = ssub.s32 128, 128
      %14 = vsyncadd [#allocation3], %s13
      %s15 = sshll.u32 [#allocation2], 4
      %s16 = int_to_ptr.vmem [resolvable:$true] %s15
      %21 = dma.hbm_to_vmem [thread:$0]  %s0, 128, %s16, [#allocation3], 64, 64, 4
    $region5: #{_run.1} parent=1 // pred_fallthru
      _
    // Predicated region
    $region6: #{_run.1} parent=1 // pred_check
      _
    $region7: #{_run.1} parent=1 // pred_check_branch
      %23 = sbr.rel (0) target = $region9
    $region8: #{_run.1} parent=1 // pred_region
      %s25 = ssub.s32 256, 256
      %26 = vsyncadd [#allocation5], %s25
      %s27 = sshll.u32 [#allocation4], 4
      %s28 = int_to_ptr.vmem [resolvable:$true] %s27
      %33 = dma.hbm_to_vmem [thread:$0]  %s1, 256, %s28, [#allocation5], 64, 64, 4
    $region9: #{_run.1} parent=1 // pred_fallthru
      _
    // Predicated region
    $region10: #{_run.1} parent=1 // pred_check
      _
    $region11: #{_run.1} parent=1 // pred_check_branch
      %35 = sbr.rel (0) target = $region13
    $region12: #{_run.1} parent=1 // pred_region
      _
    $region13: #{_run.1} parent=1 // pred_fallthru
      _
    // Predicated region
    $region14: #{_run.1} parent=1 // pred_check
      _
    $region15: #{_run.1} parent=1 // pred_check_branch
      %37 = sbr.rel (0) target = $region17
    $region16: #{_run.1} parent=1 // pred_region
      %38 = dma.done [#allocation3], 128
    $region17: #{_run.1} parent=1 // pred_fallthru
      _
    // Predicated region
    $region18: #{_run.1} parent=1 // pred_check
      _
    $region19: #{_run.1} parent=1 // pred_check_branch
      %40 = sbr.rel (0) target = $region21
    $region20: #{_run.1} parent=1 // pred_region
      %41 = dma.done [#allocation5], 256
    $region21: #{_run.1} parent=1 // pred_fallthru
      _
    %v43 = vld [vmem:[#allocation2] sm:$0xf]
    %v44 = vld [vmem:[#allocation2 + $0x4] sm:$0xf]
    %v45 = vld [vmem:[#allocation4] sm:$0xf]
    %v46 = vld [vmem:[#allocation4 + $0x4] sm:$0xf]
    %v47 = vld [vmem:[#allocation4 + $0x8] sm:$0xf]
    %v48 = vld [vmem:[#allocation4 + $0xc] sm:$0xf]
    %v49 = vld [vmem:[%s2] sm:$0x1]
    %v51 = vlaneseq
    %v52 = vshrl.u32 %v51, 7
    %v53 = vsub.s32 0, %v52
    %v54 = vrot.slane %v49, %v53
    %v58 = vunpack.c.l.b16 %v43
    %v59 = vunpack.c.l.b16 %v44
    %v60 = vpack.c.b16 %v59, %v58
    %v65 = vunpack.c.l.b16 %v45
    %v66 = vunpack.c.l.b16 %v46
    %v67 = vunpack.c.l.b16 %v47
    %v68 = vunpack.c.l.b16 %v48
    %v69 = vpack.c.b16 %v66, %v65
    %v70 = vpack.c.b16 %v68, %v67
    %vm73 = vcmask 261120
    %v75 = vsel %vm73, %v60, 0
    %77 = vmatprep.subr.bf16.mxu0 0
    %78 = vmatpush1.bf16.msra.mxu0 %v69
    %79 = vmatprep.subr.bf16.mxu0 0
    %80 = vmatpush1.bf16.msra.mxu0 %v70
    %81 = vmatprep.subr.bf16.mxu0 0
    %82 = vmatpush1.bf16.msra.mxu0 0
    %83 = vmatprep.subr.bf16.mxu0 0
    %84 = vmatpush1.bf16.msra.mxu0 0
    %85 = vmatprep.subr.bf16.mxu0 0
    %86 = vmatpush1.bf16.msra.mxu0 0
    %87 = vmatprep.subr.bf16.mxu0 0
    %88 = vmatpush1.bf16.msra.mxu0 0
    %89 = vmatprep.subr.bf16.mxu0 0
    %90 = vmatpush1.bf16.msra.mxu0 0
    %91 = vmatprep.subr.bf16.mxu0 0
    %92 = vmatpush1.bf16.msra.mxu0 0
    %93 = vmatprep.subr.bf16.mxu0 0
    %94 = vmatpush1.bf16.msra.mxu0 0
    %95 = vmatprep.subr.bf16.mxu0 0
    %96 = vmatpush1.bf16.msra.mxu0 0
    %97 = vmatprep.subr.bf16.mxu0 0
    %98 = vmatpush1.bf16.msra.mxu0 0
    %99 = vmatprep.subr.bf16.mxu0 0
    %100 = vmatpush1.bf16.msra.mxu0 0
    %101 = vmatprep.subr.bf16.mxu0 0
    %102 = vmatpush1.bf16.msra.mxu0 0
    %103 = vmatprep.subr.bf16.mxu0 0
    %104 = vmatpush1.bf16.msra.mxu0 0
    %105 = vmatprep.subr.bf16.mxu0 0
    %106 = vmatpush1.bf16.msra.mxu0 0
    %107 = vmatprep.subr.bf16.mxu0 0
    %108 = vmatpush1.bf16.msra.mxu0 0
    %109 = vmatprep.mubr.bf16.mxu0 0
    %110 = vmatmul.mubr.bf16.gmra.mrb[0].mxu0 %v75
    %v111 = vpop.f32.mrb[0].mxu0
    %v112 = vadd.f32 %v54, %v111
    %v113 = vpop.f32.mrb[0].mxu0
    %v114 = vpop.f32.mrb[0].mxu0
    %v115 = vadd.f32 %v54, %v114
    %v116 = vpop.f32.mrb[0].mxu0
    %117 = vdwg.mxu0
    %118 = vmax.xlane.f32.xlu0 %v112
    %v119 = vpop.xlane.xlu0 %118
    %120 = vmax.xlane.f32.xlu0 %v115
    %v121 = vpop.xlane.xlu0 %120
    %v122 = vsub.f32 %v112, %v119
    %v123 = vsub.f32 %v115, %v121
    %v124 = vmul.f32 %v122, 1.442695
    %v125 = vpow.pop %v124
    %v126 = vmul.f32 %v123, 1.442695
    %v127 = vpow.pop %v126
    %128 = vadd.xlane.f32.xlu0 %v125
    %v129 = vpop.xlane.xlu0 %128
    %130 = vadd.xlane.f32.xlu0 %v127
    %v131 = vpop.xlane.xlu0 %130
    %v132 = vrcp.pop %v129
    %v133 = vrcp.pop %v131
    %v134 = vmul.f32 %v125, %v132
    %v135 = vmul.f32 %v127, %v133
    %v136 = vpack.c.bf16 %v135, %v134
    %v138 = vunpack.c.l.b16 %v136
    %v139 = vunpack.c.h.b16 %v136
    %v140 = vpack.c.b16 %v138, %v138
    %v141 = vpack.c.b16 %v139, %v139
    %vm144 = vcmask 60416
    %145 = vst.msk [vmem:[%s3] sm:$0xf] %vm144, %v140
    %146 = vst.msk [vmem:[%s3 + $0x4] sm:$0xf] %vm144, %v141
    // Predicated region
    $region22: #{_run.1} parent=1 // pred_check
      _
    $region23: #{_run.1} parent=1 // pred_check_branch
      %148 = sbr.rel (0) target = $region25
    $region24: #{_run.1} parent=1 // pred_region
      _
    $region25: #{_run.1} parent=1 // pred_fallthru
      _
    // Predicated region
    $region26: #{_run.1} parent=1 // pred_check
      _
    $region27: #{_run.1} parent=1 // pred_check_branch
      %150 = sbr.rel (0) target = $region29
    $region28: #{_run.1} parent=1 // pred_region
      _
    $region29: #{_run.1} parent=1 // pred_fallthru
      _
    %151 = vsyncpa [#allocation3], 1
    %152 = vsyncpa [#allocation5], 1

</llo_original>
